<compile_context>
chip_gen: v6e
topology: v6e:2x2x1
jax: 0.10.0
libtpu: 0.0.40
codegen_flags: <defaults>
</compile_context>

<pallas_src>
import functools

import jax
import jax.numpy as jnp
from jax.experimental import pallas as pl
from jax.experimental.pallas import tpu as pltpu

IN_FEATURES = 128
OUT_FEATURES = 128
_MAX_BATCH_TILE = 4096  # safe on v5e/v6e/v7x with the 32 MiB vmem limit below


def _round_up(n: int, m: int) -> int:
    return ((n + m - 1) // m) * m


def _pick_batch_tile(b: int, cap: int) -> int:
    # Smallest (8-aligned) tile that covers B, capped so VMEM stays comfortable.
    return max(8, min(_round_up(max(b, 1), 8), cap))


def linear_clamp_kernel(clamp_ref, x_ref, wt_ref, b_ref, o_ref):
    # clamp_ref: SMEM (2,) -> [min_value, max_value] (scalar-prefetched)
    # x_ref: (tb, IN) VMEM; wt_ref: (IN, OUT) VMEM (resident); b_ref: (1, OUT)
    lo = clamp_ref[0]
    hi = clamp_ref[1]
    y = jnp.dot(x_ref[...], wt_ref[...], preferred_element_type=jnp.float32)
    y = y + b_ref[...]
    y = jnp.minimum(jnp.maximum(y, lo), hi)  # clamp_min then clamp_max
    o_ref[...] = y.astype(o_ref.dtype)


@functools.partial(jax.jit, static_argnames=("tb_cap",))
def model_forward(x, weight, bias, min_value, max_value, *, tb_cap=_MAX_BATCH_TILE):
    """Equivalent of Model.forward(x, min_value, max_value)."""
    B, in_f = x.shape
    out_f = weight.shape[0]

    tb = _pick_batch_tile(B, tb_cap)
    grid = (pl.cdiv(B, tb),)  # partial trailing block is masked by Pallas

    w_t = weight.T                  # one-time (64 KiB) relayout in the wrapper
    b2 = bias.reshape(1, out_f)
    clamp = jnp.array([min_value, max_value], dtype=jnp.float32)

    return pl.pallas_call(
        linear_clamp_kernel,
        out_shape=jax.ShapeDtypeStruct((B, out_f), x.dtype),
        grid_spec=pltpu.PrefetchScalarGridSpec(
            num_scalar_prefetch=1,
            grid=grid,
            in_specs=[
                pl.BlockSpec((tb, in_f), lambda i, _s: (i, 0)),      # x tile
                pl.BlockSpec((in_f, out_f), lambda i, _s: (0, 0)),   # W^T (resident)
                pl.BlockSpec((1, out_f), lambda i, _s: (0, 0)),      # bias (resident)
            ],
            out_specs=pl.BlockSpec((tb, out_f), lambda i, _s: (i, 0)),
        ),
        compiler_params=pltpu.CompilerParams(
            dimension_semantics=("parallel",),
            vmem_limit_bytes=32 * 1024 * 1024,
        ),
    )(clamp, x, w_t, b2)


if __name__ == "__main__":
    key = jax.random.PRNGKey(0)
    kx, kw, kb, kx2 = jax.random.split(key, 4)

    # __input__ = torch.randn(1, 128)
    x = jax.random.normal(kx, (1, IN_FEATURES), dtype=jnp.float32)

    # Deterministic nn.Linear(128, 128)-style init: U(-1/sqrt(in), 1/sqrt(in))
    bound = 1.0 / (IN_FEATURES ** 0.5)
    weight = jax.random.uniform(kw, (OUT_FEATURES, IN_FEATURES),
                                minval=-bound, maxval=bound, dtype=jnp.float32)
    bias = jax.random.uniform(kb, (OUT_FEATURES,),
                              minval=-bound, maxval=bound, dtype=jnp.float32)

    def ref_fn(x, w, b, lo, hi):
        return jnp.minimum(jnp.maximum(x @ w.T + b, lo), hi)

    # Spec case: min_value = max_value = 1
    out = model_forward(x, weight, bias, 1.0, 1.0)
    jax.block_until_ready(out)
    assert out.shape == (1, OUT_FEATURES)
    assert jnp.allclose(out, ref_fn(x, weight, bias, 1.0, 1.0),
                        atol=1e-5, rtol=1e-5), "mismatch vs reference (1, 1)"

    # Non-degenerate clamp window (no recompile: clamp values are traced scalars)
    out2 = model_forward(x, weight, bias, -0.25, 0.5)
    jax.block_until_ready(out2)
    assert jnp.allclose(out2, ref_fn(x, weight, bias, -0.25, 0.5),
                        atol=1e-5, rtol=1e-5), "mismatch vs reference (-0.25, 0.5)"

    # Ragged batch with a multi-step grid + masked partial trailing block
    # (exercises the no-pad / no-slice path the perf review asked for).
    xr = jax.random.normal(kx2, (37, IN_FEATURES), dtype=jnp.float32)
    out3 = model_forward(xr, weight, bias, -0.25, 0.5, tb_cap=16)
    jax.block_until_ready(out3)
    assert out3.shape == (37, OUT_FEATURES)
    assert jnp.allclose(out3, ref_fn(xr, weight, bias, -0.25, 0.5),
                        atol=1e-5, rtol=1e-5), "mismatch vs reference (ragged B)"

    print("KERNEL_OK")
</pallas_src>

<mosaic_0001>
module attributes {stable_mosaic.version = 11 : i64} {
  func.func @linear_clamp_kernel(%arg0: i32, %arg1: memref<2xf32, #tpu.memory_space<smem>>, %arg2: memref<8x128xf32, #tpu.memory_space<vmem>>, %arg3: memref<128x128xf32, #tpu.memory_space<vmem>>, %arg4: memref<1x128xf32, #tpu.memory_space<vmem>>, %arg5: memref<8x128xf32, #tpu.memory_space<vmem>>) attributes {dimension_semantics = [#tpu.dimension_semantics<parallel>], iteration_bounds = array<i64: 1>, scalar_prefetch = 1 : i64, scratch_operands = 0 : i64, tpu.core_type = #tpu.core_type<tc>, window_params = [{transform_indices = @transform_0, window_bounds = array<i64: 8, 128>}, {pipeline_mode = #tpu.pipeline_mode<synchronous>, transform_indices = @transform_1, window_bounds = array<i64: 128, 128>}, {pipeline_mode = #tpu.pipeline_mode<synchronous>, transform_indices = @transform_2, window_bounds = array<i64: 1, 128>}, {transform_indices = @transform_3, window_bounds = array<i64: 8, 128>}]} {
    %c0 = arith.constant 0 : index
    %0 = memref.load %arg1[%c0] : memref<2xf32, #tpu.memory_space<smem>>
    %c1 = arith.constant 1 : index
    %1 = memref.load %arg1[%c1] : memref<2xf32, #tpu.memory_space<smem>>
    %c0_0 = arith.constant 0 : index
    %c0_1 = arith.constant 0 : index
    %2 = vector.load %arg2[%c0_0, %c0_1] : memref<8x128xf32, #tpu.memory_space<vmem>>, vector<8x128xf32>
    %c0_2 = arith.constant 0 : index
    %c0_3 = arith.constant 0 : index
    %3 = vector.load %arg3[%c0_2, %c0_3] : memref<128x128xf32, #tpu.memory_space<vmem>>, vector<128x128xf32>
    %cst = arith.constant dense<0.000000e+00> : vector<8x128xf32>
    %4 = tpu.matmul %2, %3, %cst {dimension_numbers = #tpu.dot_dimension_numbers<[1], [0], [0], [1], [0, 0, 1, 1], [], []>} : vector<8x128xf32>, vector<128x128xf32>, vector<8x128xf32> -> vector<8x128xf32>
    %c0_4 = arith.constant 0 : index
    %c0_5 = arith.constant 0 : index
    %5 = vector.load %arg4[%c0_4, %c0_5] : memref<1x128xf32, #tpu.memory_space<vmem>>, vector<1x128xf32>
    %6 = vector.broadcast %5 : vector<1x128xf32> to vector<8x128xf32>
    %7 = arith.addf %4, %6 : vector<8x128xf32>
    %8 = vector.broadcast %0 : f32 to vector<8x128xf32>
    %9 = arith.maximumf %7, %8 : vector<8x128xf32>
    %10 = vector.broadcast %1 : f32 to vector<8x128xf32>
    %11 = arith.minimumf %9, %10 : vector<8x128xf32>
    %c0_6 = arith.constant 0 : index
    %c0_7 = arith.constant 0 : index
    %12 = vector.load %arg5[%c0_6, %c0_7] : memref<8x128xf32, #tpu.memory_space<vmem>>, vector<8x128xf32>
    tpu.vector_store %arg5[%c0_6, %c0_7], %11 {strides = array<i32>} : memref<8x128xf32, #tpu.memory_space<vmem>>, vector<8x128xf32>,
    return
  }
  func.func @transform_0(%arg0: i32, %arg1: memref<2xf32, #tpu.memory_space<smem>>) -> (i32, i32) {
    %c0_i32 = arith.constant 0 : i32
    %c0_i32_0 = arith.constant 0 : i32
    return %arg0, %c0_i32 : i32, i32
  }
  func.func @transform_1(%arg0: i32, %arg1: memref<2xf32, #tpu.memory_space<smem>>) -> (i32, i32) {
    %c0_i32 = arith.constant 0 : i32
    %c0_i32_0 = arith.constant 0 : i32
    %c0_i32_1 = arith.constant 0 : i32
    return %c0_i32, %c0_i32_0 : i32, i32
  }
  func.func @transform_2(%arg0: i32, %arg1: memref<2xf32, #tpu.memory_space<smem>>) -> (i32, i32) {
    %c0_i32 = arith.constant 0 : i32
    %c0_i32_0 = arith.constant 0 : i32
    %c0_i32_1 = arith.constant 0 : i32
    return %c0_i32, %c0_i32_0 : i32, i32
  }
  func.func @transform_3(%arg0: i32, %arg1: memref<2xf32, #tpu.memory_space<smem>>) -> (i32, i32) {
    %c0_i32 = arith.constant 0 : i32
    %c0_i32_0 = arith.constant 0 : i32
    return %arg0, %c0_i32 : i32, i32
  }
}

</mosaic_0001>

<llo_original>
// kernel: model_forward.1
$region0: #{model_forward.1}
  #allocation0 [shape = 'u32[]', space=smem, size = 0x4, offset = 0x4, fixed_abs, tag = 'smem constant byte address 0x4 - core index']
  #allocation1 [shape = 'u32[144,128]{1,0:T(1,128)}', space=vmem, size = 0x12000, scoped, tag = 'internal scratch']
  #allocation2 [shape = 's32[1]{0}', space=sflag, size = 0x4, scoped, tag = 'scoped memory for model_forward.1']
  #allocation3 [shape = 'u8[512]{0}', space=smem, size = 0x200, scoped, tag = 'prefetched SMEM operand 0']
  %s0 = inlined_call_operand.vmem [shape: f32[2], index: 0, kind: input, shape index: {}]
  %s1 = inlined_call_operand.vmem [shape: f32[1,128], index: 1, kind: input, shape index: {}]
  %s2 = inlined_call_operand.vmem [shape: f32[128,128], index: 2, kind: input, shape index: {}]
  %s3 = inlined_call_operand.vmem [shape: f32[1,128], index: 3, kind: input, shape index: {}]
  %s4 = inlined_call_operand.hbm [shape: f32[1,128], index: 4, kind: output, shape index: {}]
  %s5 = sld [smem:[#allocation0]]
  $region22: #{model_forward.1} parent=0
    _
  %s7 = ssub.s32 1, %s5
  %s8 = scalar_select 0, %s7, %s5
  %s9 = sshll.u32 %s0, 4
  %s10 = int_to_ptr.vmem [resolvable:$true] %s9
  %12 = dma.vmem_to_smem %s10, 16, [#allocation3], [#allocation2]
  %13 = dma.done [#allocation2], 16
  %14 = sfence
  $region1: #{model_forward.1} parent=0
    #allocation4 [shape = 'u8[4096]{0}', space=vmem, size = 0x1000, scoped, tag = 'output window, operand 0, single buffered']
    #allocation5 [shape = 's32[1]{0}', space=sflag, size = 0x4, scoped, tag = 'scoped memory for model_forward.1']
    %15 = vsyncpa [#allocation5], 0
    // Predicated region
    $region2: #{model_forward.1} parent=1 // pred_check
      _
    $region3: #{model_forward.1} parent=1 // pred_check_branch
      %17 = sbr.rel (0) target = $region5
    $region4: #{model_forward.1} parent=1 // pred_region
      _
    $region5: #{model_forward.1} parent=1 // pred_fallthru
      _
    // Predicated region
    $region6: #{model_forward.1} parent=1 // pred_check
      _
    $region7: #{model_forward.1} parent=1 // pred_check_branch
      %19 = sbr.rel (0) target = $region9
    $region8: #{model_forward.1} parent=1 // pred_region
      _
    $region9: #{model_forward.1} parent=1 // pred_fallthru
      _
    // Predicated region
    $region10: #{model_forward.1} parent=1 // pred_check
      _
    $region11: #{model_forward.1} parent=1 // pred_check_branch
      %21 = sbr.rel (0) target = $region13
    $region12: #{model_forward.1} parent=1 // pred_region
      _
    $region13: #{model_forward.1} parent=1 // pred_fallthru
      _
    %s22 = sld [smem:[#allocation3]]
    %s23 = sld [smem:[#allocation3 + $0x1]]
    %v24 = vld [vmem:[%s1] sm:$0xff]
    %v25 = vld [vmem:[%s2] sm:$0xff]
    %v26 = vld [vmem:[%s2 + $0x8] sm:$0xff]
    %v27 = vld [vmem:[%s2 + $0x10] sm:$0xff]
    %v28 = vld [vmem:[%s2 + $0x18] sm:$0xff]
    %v29 = vld [vmem:[%s2 + $0x20] sm:$0xff]
    %v30 = vld [vmem:[%s2 + $0x28] sm:$0xff]
    %v31 = vld [vmem:[%s2 + $0x30] sm:$0xff]
    %v32 = vld [vmem:[%s2 + $0x38] sm:$0xff]
    %v33 = vld [vmem:[%s2 + $0x40] sm:$0xff]
    %v34 = vld [vmem:[%s2 + $0x48] sm:$0xff]
    %v35 = vld [vmem:[%s2 + $0x50] sm:$0xff]
    %v36 = vld [vmem:[%s2 + $0x58] sm:$0xff]
    %v37 = vld [vmem:[%s2 + $0x60] sm:$0xff]
    %v38 = vld [vmem:[%s2 + $0x68] sm:$0xff]
    %v39 = vld [vmem:[%s2 + $0x70] sm:$0xff]
    %v40 = vld [vmem:[%s2 + $0x78] sm:$0xff]
    %v41 = vld [vmem:[%s3] sm:$0x1]
    %v43 = vlaneseq
    %v44 = vshrl.u32 %v43, 7
    %v45 = vsub.s32 0, %v44
    %v46 = vrot.slane %v41, %v45
    %48 = vmatprep.subr.mxu0 0.0
    %49 = vmatpush1.msra.mxu0 %v40
    %50 = vmatprep.subr.mxu0 0.0
    %51 = vmatpush1.msra.mxu0 %v39
    %52 = vmatprep.subr.mxu0 0.0
    %53 = vmatpush1.msra.mxu0 %v38
    %54 = vmatprep.subr.mxu0 0.0
    %55 = vmatpush1.msra.mxu0 %v37
    %56 = vmatprep.subr.mxu0 0.0
    %57 = vmatpush1.msra.mxu0 %v36
    %58 = vmatprep.subr.mxu0 0.0
    %59 = vmatpush1.msra.mxu0 %v35
    %60 = vmatprep.subr.mxu0 0.0
    %61 = vmatpush1.msra.mxu0 %v34
    %62 = vmatprep.subr.mxu0 0.0
    %63 = vmatpush1.msra.mxu0 %v33
    %64 = vmatprep.subr.mxu0 0.0
    %65 = vmatpush1.msra.mxu0 %v32
    %66 = vmatprep.subr.mxu0 0.0
    %67 = vmatpush1.msra.mxu0 %v31
    %68 = vmatprep.subr.mxu0 0.0
    %69 = vmatpush1.msra.mxu0 %v30
    %70 = vmatprep.subr.mxu0 0.0
    %71 = vmatpush1.msra.mxu0 %v29
    %72 = vmatprep.subr.mxu0 0.0
    %73 = vmatpush1.msra.mxu0 %v28
    %74 = vmatprep.subr.mxu0 0.0
    %75 = vmatpush1.msra.mxu0 %v27
    %76 = vmatprep.subr.mxu0 0.0
    %77 = vmatpush1.msra.mxu0 %v26
    %78 = vmatprep.subr.mxu0 0.0
    %79 = vmatpush1.msra.mxu0 %v25
    %80 = vmatprep.subr.mxu0 0.0
    %81 = vmatpush2.msra.mxu0 0.0
    %82 = vmatprep.subr.mxu0 0.0
    %83 = vmatpush2.msra.mxu0 0.0
    %84 = vmatprep.subr.mxu0 0.0
    %85 = vmatpush2.msra.mxu0 0.0
    %86 = vmatprep.subr.mxu0 0.0
    %87 = vmatpush2.msra.mxu0 0.0
    %88 = vmatprep.subr.mxu0 0.0
    %89 = vmatpush2.msra.mxu0 0.0
    %90 = vmatprep.subr.mxu0 0.0
    %91 = vmatpush2.msra.mxu0 0.0
    %92 = vmatprep.subr.mxu0 0.0
    %93 = vmatpush2.msra.mxu0 0.0
    %94 = vmatprep.subr.mxu0 0.0
    %95 = vmatpush2.msra.mxu0 0.0
    %96 = vmatprep.subr.mxu0 0.0
    %97 = vmatpush2.msra.mxu0 0.0
    %98 = vmatprep.subr.mxu0 0.0
    %99 = vmatpush2.msra.mxu0 0.0
    %100 = vmatprep.subr.mxu0 0.0
    %101 = vmatpush2.msra.mxu0 0.0
    %102 = vmatprep.subr.mxu0 0.0
    %103 = vmatpush2.msra.mxu0 0.0
    %104 = vmatprep.subr.mxu0 0.0
    %105 = vmatpush2.msra.mxu0 0.0
    %106 = vmatprep.subr.mxu0 0.0
    %107 = vmatpush2.msra.mxu0 0.0
    %108 = vmatprep.subr.mxu0 0.0
    %109 = vmatpush2.msra.mxu0 0.0
    %110 = vmatprep.subr.mxu0 0.0
    %111 = vmatpush2.msra.mxu0 0.0
    %112 = vmatprep.mubr.f32.mxu0 0.0
    %113 = vmatmul.mubr.f32.gmra.mxu0 %v24
    %v114 = vpop.f32.mrf.mxu0
    %v115 = vadd.f32 %v46, %v114
    %v116 = vpop.f32.mrf.mxu0
    %117 = vdwg.mxu0
    %v118 = vstv %s22
    %v119 = vmax.f32 %v115, %v118
    %v120 = vstv %s23
    %v121 = vmin.f32 %v119, %v120
    %122 = vst [vmem:[#allocation4] sm:$0xff] %v121
    // Predicated region
    $region14: #{model_forward.1} parent=1 // pred_check
      _
    $region15: #{model_forward.1} parent=1 // pred_check_branch
      %124 = sbr.rel (0) target = $region17
    $region16: #{model_forward.1} parent=1 // pred_region
      %s126 = ssub.s32 128, 16
      %127 = vsyncadd [#allocation5], %s126
      %s128 = sshll.u32 [#allocation4], 4
      %s129 = int_to_ptr.vmem [resolvable:$true] %s128
      %134 = dma.vmem_to_hbm [thread:$0]  %s129, 16, %s4, [#allocation5], 16, 16, 1
    $region17: #{model_forward.1} parent=1 // pred_fallthru
      _
    // Predicated region
    $region18: #{model_forward.1} parent=1 // pred_check
      _
    $region19: #{model_forward.1} parent=1 // pred_check_branch
      %136 = sbr.rel (0) target = $region21
    $region20: #{model_forward.1} parent=1 // pred_region
      %137 = dma.done [#allocation5], 128
    $region21: #{model_forward.1} parent=1 // pred_fallthru
      _
    %138 = vsyncpa [#allocation5], 1

</llo_original>
